<compile_context>
chip_gen: v7x
topology: tpu7x:2x2x1
jax: 0.10.0
libtpu: 0.0.40
codegen_flags: <defaults>
</compile_context>

<pallas_src>
import jax
import jax.numpy as jnp
from jax.experimental import pallas as pl
from jax.experimental.pallas import tpu as pltpu


def _round_up(x, m):
    return (x + m - 1) // m * m


def _choose_tile_n(n, d, tb):
    """Concept rows per grid step.

    Target ~0.5 MiB per streamed f32 concept block so the per-step DMA is
    large enough to approach the HBM roofline, while staying far below every
    generation's VMEM budget (v7x: 64 MiB physical per TC). Rounded to the
    f32 sublane granule (8); never larger than the (rounded) concept count.
    """
    target_bytes = 512 * 1024
    row_bytes = tb * d * 4
    tn = max(8, target_bytes // row_bytes)
    tn = min(tn, 4096, _round_up(n, 8))
    return int(_round_up(tn, 8))


def _vmem_limit_bytes(tb, tile_n, d):
    c_blk = tb * tile_n * d * 4          # streamed f32 concept block
    k_blk = tb * d * 4
    o_blk = tb * d * 4
    scratch = tb * (d + 2) * 4
    # Double-buffered in/out blocks + one extra concept-block-sized temp for
    # the masked copy on ragged tiles, then 2x headroom for compiler scratch.
    need = 2 * (c_blk + k_blk + o_blk) + c_blk + scratch
    # Cap at 48 MiB: leaves headroom inside v7x's 64 MiB physical VMEM per TC;
    # v5e / v6e (128 MiB) could go higher but these block sizes never need it.
    return int(min(48 * 1024 * 1024, max(8 * 1024 * 1024, 2 * need)))


def _make_kernel(n_concepts, tile_n):
    """grid = (batch_blocks, concept_tiles): online softmax over concept tiles."""
    needs_mask = (n_concepts % tile_n) != 0   # statically elided when divisible

    def kernel(k_ref, c_ref, out_ref, m_scr, l_scr, acc_scr):
        ni = pl.program_id(1)

        @pl.when(ni == 0)
        def _init():
            m_scr[...] = jnp.full_like(m_scr, -jnp.inf)
            l_scr[...] = jnp.zeros_like(l_scr)
            acc_scr[...] = jnp.zeros_like(acc_scr)

        c = c_ref[...]                                   # (TB, TN, D) f32
        k = k_ref[...]                                   # (TB, 1, D)  f32

        if needs_mask:
            # Ragged last tile: rows past n_concepts hold unspecified data
            # (no wrapper-side padding pass).  Zero those concept rows so the
            # weighted-sum matmul cannot pick up NaN/Inf garbage; their scores
            # are forced to -inf below so they get zero softmax weight.
            row = ni * tile_n + jax.lax.broadcasted_iota(
                jnp.int32, (1, tile_n, 1), 1)
            c = jnp.where(row < n_concepts, c, 0.0)

        # Scores: batched MXU matmul (1, D) x (D, TN) per batch row,
        # contracting the shared last dim -- no transposed copy of c.
        s = jnp.einsum("bqd,bnd->bqn", k, c,
                       preferred_element_type=jnp.float32)   # (TB, 1, TN)
        if needs_mask:
            col = ni * tile_n + jax.lax.broadcasted_iota(
                jnp.int32, (1, 1, tile_n), 2)
            s = jnp.where(col < n_concepts, s, -jnp.inf)

        # Online softmax across concept tiles (all f32 VPU/EUP work).
        m_prev = m_scr[...]
        m_new = jnp.maximum(m_prev, jnp.max(s, axis=-1, keepdims=True))
        alpha = jnp.exp(m_prev - m_new)
        p = jnp.exp(s - m_new)                               # (TB, 1, TN)
        l_scr[...] = alpha * l_scr[...] + jnp.sum(p, axis=-1, keepdims=True)
        acc_scr[...] = alpha * acc_scr[...] + jnp.einsum(
            "bqn,bnd->bqd", p, c, preferred_element_type=jnp.float32)
        m_scr[...] = m_new

        @pl.when(ni == pl.num_programs(1) - 1)
        def _finalize():
            out_ref[...] = (acc_scr[...] / l_scr[...]).astype(out_ref.dtype)

    return kernel


def _project(query_embs, params):
    """k = W(q_proj(query)) for the whole batch as plain XLA matmuls."""
    q = query_embs @ params["wq_t"] + params["bq"]           # (B, D)
    return q @ params["ww_t"] + params["bw"]                 # (B, D)


@jax.jit
def hyperpath_attention_aggregator_batched(query_embs, concept_embs, params):
    """B independent hyperpath aggregations in a single pallas_call.

    query_embs   : (B, D)    f32
    concept_embs : (B, N, D) f32
    returns      : (B, D)    f32
    """
    b, d = query_embs.shape
    n = concept_embs.shape[1]

    # Projections hoisted out of the kernel (full MXU utilization, once).
    k = _project(query_embs, params).reshape(b, 1, d)        # (B, 1, D)

    tb = max(1, min(8, b))                                   # batch rows / step
    tile_n = _choose_tile_n(n, d, tb)
    grid = (pl.cdiv(b, tb), pl.cdiv(n, tile_n))

    grid_spec = pltpu.PrefetchScalarGridSpec(
        num_scalar_prefetch=0,
        grid=grid,
        in_specs=[
            pl.BlockSpec((tb, 1, d), lambda bi, ni: (bi, 0, 0)),        # k
            pl.BlockSpec((tb, tile_n, d), lambda bi, ni: (bi, ni, 0)),  # concepts
        ],
        out_specs=pl.BlockSpec((tb, 1, d), lambda bi, ni: (bi, 0, 0)),
        scratch_shapes=[
            pltpu.VMEM((tb, 1, 1), jnp.float32),   # running max m
            pltpu.VMEM((tb, 1, 1), jnp.float32),   # running denominator l
            pltpu.VMEM((tb, 1, d), jnp.float32),   # running weighted sum
        ],
    )

    out = pl.pallas_call(
        _make_kernel(n, tile_n),
        out_shape=jax.ShapeDtypeStruct((b, 1, d), query_embs.dtype),
        grid_spec=grid_spec,
        compiler_params=pltpu.CompilerParams(
            dimension_semantics=("parallel", "arbitrary"),
            vmem_limit_bytes=_vmem_limit_bytes(tb, tile_n, d),
        ),
    )(k, concept_embs)
    return out.reshape(b, d)


def hyperpath_attention_aggregator(query_emb, concept_embs, params):
    """Module-parity forward: query_emb (1, D), concept_embs (N, D) -> (1, D)."""
    out = hyperpath_attention_aggregator_batched(
        query_emb.reshape(1, -1), concept_embs[None, :, :], params)
    return out.reshape(1, -1)


def init_params(embed_dim, key):
    """nn.Linear-style init; weights stored pre-transposed (in, out) in f32,
    biases pre-reshaped to (1, D) -- no per-call layout work."""
    k1, k2, k3, k4 = jax.random.split(key, 4)
    bound = 1.0 / (embed_dim ** 0.5)
    wq = jax.random.uniform(k1, (embed_dim, embed_dim), jnp.float32, -bound, bound)
    ww = jax.random.uniform(k3, (embed_dim, embed_dim), jnp.float32, -bound, bound)
    return {
        "wq_t": wq.T,
        "bq": jax.random.uniform(k2, (1, embed_dim), jnp.float32, -bound, bound),
        "ww_t": ww.T,
        "bw": jax.random.uniform(k4, (1, embed_dim), jnp.float32, -bound, bound),
    }


def _reference(query_embs, concept_embs, params):
    """Pure-JAX f32 reference (same hoisted projection, full-precision dots)."""
    k = _project(query_embs, params)                               # (B, D)
    scores = jnp.einsum("bnd,bd->bn", concept_embs, k,
                        precision=jax.lax.Precision.HIGHEST)       # (B, N)
    weights = jax.nn.softmax(scores, axis=-1)
    return jnp.einsum("bn,bnd->bd", weights, concept_embs,
                      precision=jax.lax.Precision.HIGHEST)         # (B, D)


if __name__ == "__main__":
    embed_dim = 32
    n_concepts = 8
    batch = 4

    key = jax.random.PRNGKey(0)
    k_q, k_c, k_p = jax.random.split(key, 3)
    query_embs = jax.random.normal(k_q, (batch, embed_dim), jnp.float32)
    concept_embs = jax.random.normal(k_c, (batch, n_concepts, embed_dim), jnp.float32)
    params = init_params(embed_dim, k_p)

    # Batched path (single tile, single batch block).
    out = jax.block_until_ready(
        hyperpath_attention_aggregator_batched(query_embs, concept_embs, params))
    ref = _reference(query_embs, concept_embs, params)
    assert out.shape == (batch, embed_dim)
    assert jnp.allclose(out, ref, atol=1e-2, rtol=1e-2), (out, ref)

    # Module-parity single-query path (matches the PyTorch forward signature).
    out1 = jax.block_until_ready(
        hyperpath_attention_aggregator(query_embs[:1], concept_embs[0], params))
    assert out1.shape == (1, embed_dim)
    assert jnp.allclose(out1, ref[:1], atol=1e-2, rtol=1e-2), (out1, ref[:1])

    # Streaming path: ragged batch blocks (11 % TB != 0) and a ragged last
    # concept tile (1040 % tile_n != 0) exercise the in-kernel masking.
    b2, n2 = 11, 1040
    kq2, kc2 = jax.random.split(jax.random.PRNGKey(1))
    q2 = jax.random.normal(kq2, (b2, embed_dim), jnp.float32)
    c2 = jax.random.normal(kc2, (b2, n2, embed_dim), jnp.float32)
    out2 = jax.block_until_ready(
        hyperpath_attention_aggregator_batched(q2, c2, params))
    ref2 = _reference(q2, c2, params)
    assert jnp.allclose(out2, ref2, atol=1e-2, rtol=1e-2), (out2, ref2)

    print("KERNEL_OK")
</pallas_src>

<mosaic_0001>
module attributes {stable_mosaic.version = 11 : i64} {
  func.func @kernel(%arg0: i32, %arg1: i32, %arg2: memref<4x1x32xf32, #tpu.memory_space<vmem>>, %arg3: memref<4x8x32xf32, #tpu.memory_space<vmem>>, %arg4: memref<4x1x32xf32, #tpu.memory_space<vmem>>, %arg5: memref<4x1x1xf32, #tpu.memory_space<vmem>>, %arg6: memref<4x1x1xf32, #tpu.memory_space<vmem>>, %arg7: memref<4x1x32xf32, #tpu.memory_space<vmem>>) attributes {dimension_semantics = [#tpu.dimension_semantics<parallel>, #tpu.dimension_semantics<arbitrary>], iteration_bounds = array<i64: 1, 1>, scalar_prefetch = 0 : i64, scratch_operands = 3 : i64, tpu.core_type = #tpu.core_type<tc>, window_params = [{transform_indices = @transform_0, window_bounds = array<i64: 4, 1, 32>}, {transform_indices = @transform_1, window_bounds = array<i64: 4, 8, 32>}, {transform_indices = @transform_2, window_bounds = array<i64: 4, 1, 32>}]} {
    %c0_i32 = arith.constant 0 : i32
    %0 = arith.cmpi eq, %arg1, %c0_i32 : i32
    %1 = arith.extui %0 : i1 to i32
    %c0_i32_0 = arith.constant 0 : i32
    %2 = arith.cmpi ne, %1, %c0_i32_0 : i32
    scf.if %2 {
      %cst_29 = arith.constant 0xFF800000 : f32
      %31 = vector.broadcast %cst_29 : f32 to vector<4x1x1xf32>
      %c0_30 = arith.constant 0 : index
      %c0_31 = arith.constant 0 : index
      %c0_32 = arith.constant 0 : index
      %32 = vector.load %arg5[%c0_30, %c0_31, %c0_32] : memref<4x1x1xf32, #tpu.memory_space<vmem>>, vector<4x1x1xf32>
      tpu.vector_store %arg5[%c0_30, %c0_31, %c0_32], %31 {strides = array<i32>} : memref<4x1x1xf32, #tpu.memory_space<vmem>>, vector<4x1x1xf32>,
      %cst_33 = arith.constant 0.000000e+00 : f32
      %33 = vector.broadcast %cst_33 : f32 to vector<4x1x1xf32>
      %c0_34 = arith.constant 0 : index
      %c0_35 = arith.constant 0 : index
      %c0_36 = arith.constant 0 : index
      %34 = vector.load %arg6[%c0_34, %c0_35, %c0_36] : memref<4x1x1xf32, #tpu.memory_space<vmem>>, vector<4x1x1xf32>
      tpu.vector_store %arg6[%c0_34, %c0_35, %c0_36], %33 {strides = array<i32>} : memref<4x1x1xf32, #tpu.memory_space<vmem>>, vector<4x1x1xf32>,
      %cst_37 = arith.constant 0.000000e+00 : f32
      %35 = vector.broadcast %cst_37 : f32 to vector<4x1x32xf32>
      %c0_38 = arith.constant 0 : index
      %c0_39 = arith.constant 0 : index
      %c0_40 = arith.constant 0 : index
      %36 = vector.load %arg7[%c0_38, %c0_39, %c0_40] : memref<4x1x32xf32, #tpu.memory_space<vmem>>, vector<4x1x32xf32>
      tpu.vector_store %arg7[%c0_38, %c0_39, %c0_40], %35 {strides = array<i32>} : memref<4x1x32xf32, #tpu.memory_space<vmem>>, vector<4x1x32xf32>,
    } else {
    }
    %c0 = arith.constant 0 : index
    %c0_1 = arith.constant 0 : index
    %c0_2 = arith.constant 0 : index
    %3 = vector.load %arg3[%c0, %c0_1, %c0_2] : memref<4x8x32xf32, #tpu.memory_space<vmem>>, vector<4x8x32xf32>
    %c0_3 = arith.constant 0 : index
    %c0_4 = arith.constant 0 : index
    %c0_5 = arith.constant 0 : index
    %4 = vector.load %arg2[%c0_3, %c0_4, %c0_5] : memref<4x1x32xf32, #tpu.memory_space<vmem>>, vector<4x1x32xf32>
    "tpu.trace_start"() <{level = 10 : i32, message = "bqd,bnd->bqn"}> : () -> ()
    %cst = arith.constant dense<0.000000e+00> : vector<4x1x8xf32>
    %5 = tpu.matmul %4, %3, %cst {dimension_numbers = #tpu.dot_dimension_numbers<[2], [2], [1], [1], [0, 0, 0, 1, 1, 1], [0], [0]>} : vector<4x1x32xf32>, vector<4x8x32xf32>, vector<4x1x8xf32> -> vector<4x1x8xf32>
    "tpu.trace_stop"() : () -> ()
    %c0_6 = arith.constant 0 : index
    %c0_7 = arith.constant 0 : index
    %c0_8 = arith.constant 0 : index
    %6 = vector.load %arg5[%c0_6, %c0_7, %c0_8] : memref<4x1x1xf32, #tpu.memory_space<vmem>>, vector<4x1x1xf32>
    %cst_9 = arith.constant dense<0xFF800000> : vector<4x1xf32>
    %7 = vector.multi_reduction <maximumf>, %5, %cst_9 [2] : vector<4x1x8xf32> to vector<4x1xf32>
    %8 = vector.shape_cast %7 : vector<4x1xf32> to vector<4x1x1xf32>
    %9 = arith.maximumf %6, %8 : vector<4x1x1xf32>
    %10 = arith.subf %6, %9 : vector<4x1x1xf32>
    %11 = math.exp %10 : vector<4x1x1xf32>
    %12 = vector.broadcast %9 : vector<4x1x1xf32> to vector<4x1x8xf32>
    %13 = arith.subf %5, %12 : vector<4x1x8xf32>
    %14 = math.exp %13 : vector<4x1x8xf32>
    %c0_10 = arith.constant 0 : index
    %c0_11 = arith.constant 0 : index
    %c0_12 = arith.constant 0 : index
    %15 = vector.load %arg6[%c0_10, %c0_11, %c0_12] : memref<4x1x1xf32, #tpu.memory_space<vmem>>, vector<4x1x1xf32>
    %16 = arith.mulf %11, %15 : vector<4x1x1xf32>
    %cst_13 = arith.constant dense<0.000000e+00> : vector<4x1xf32>
    %17 = vector.multi_reduction <add>, %14, %cst_13 [2] : vector<4x1x8xf32> to vector<4x1xf32>
    %18 = vector.shape_cast %17 : vector<4x1xf32> to vector<4x1x1xf32>
    %19 = arith.addf %16, %18 : vector<4x1x1xf32>
    %c0_14 = arith.constant 0 : index
    %c0_15 = arith.constant 0 : index
    %c0_16 = arith.constant 0 : index
    %20 = vector.load %arg6[%c0_14, %c0_15, %c0_16] : memref<4x1x1xf32, #tpu.memory_space<vmem>>, vector<4x1x1xf32>
    tpu.vector_store %arg6[%c0_14, %c0_15, %c0_16], %19 {strides = array<i32>} : memref<4x1x1xf32, #tpu.memory_space<vmem>>, vector<4x1x1xf32>,
    %c0_17 = arith.constant 0 : index
    %c0_18 = arith.constant 0 : index
    %c0_19 = arith.constant 0 : index
    %21 = vector.load %arg7[%c0_17, %c0_18, %c0_19] : memref<4x1x32xf32, #tpu.memory_space<vmem>>, vector<4x1x32xf32>
    %22 = vector.broadcast %11 : vector<4x1x1xf32> to vector<4x1x32xf32>
    %23 = arith.mulf %22, %21 : vector<4x1x32xf32>
    "tpu.trace_start"() <{level = 10 : i32, message = "bqn,bnd->bqd"}> : () -> ()
    %cst_20 = arith.constant dense<0.000000e+00> : vector<4x1x32xf32>
    %24 = tpu.matmul %14, %3, %cst_20 {dimension_numbers = #tpu.dot_dimension_numbers<[2], [1], [1], [2], [0, 0, 0, 1, 1, 2], [0], [0]>} : vector<4x1x8xf32>, vector<4x8x32xf32>, vector<4x1x32xf32> -> vector<4x1x32xf32>
    "tpu.trace_stop"() : () -> ()
    %25 = arith.addf %23, %24 : vector<4x1x32xf32>
    %c0_21 = arith.constant 0 : index
    %c0_22 = arith.constant 0 : index
    %c0_23 = arith.constant 0 : index
    %26 = vector.load %arg7[%c0_21, %c0_22, %c0_23] : memref<4x1x32xf32, #tpu.memory_space<vmem>>, vector<4x1x32xf32>
    tpu.vector_store %arg7[%c0_21, %c0_22, %c0_23], %25 {strides = array<i32>} : memref<4x1x32xf32, #tpu.memory_space<vmem>>, vector<4x1x32xf32>,
    %c0_24 = arith.constant 0 : index
    %c0_25 = arith.constant 0 : index
    %c0_26 = arith.constant 0 : index
    %27 = vector.load %arg5[%c0_24, %c0_25, %c0_26] : memref<4x1x1xf32, #tpu.memory_space<vmem>>, vector<4x1x1xf32>
    tpu.vector_store %arg5[%c0_24, %c0_25, %c0_26], %9 {strides = array<i32>} : memref<4x1x1xf32, #tpu.memory_space<vmem>>, vector<4x1x1xf32>,
    %c0_i32_27 = arith.constant 0 : i32
    %28 = arith.cmpi eq, %arg1, %c0_i32_27 : i32
    %29 = arith.extui %28 : i1 to i32
    %c0_i32_28 = arith.constant 0 : i32
    %30 = arith.cmpi ne, %29, %c0_i32_28 : i32
    scf.if %30 {
      %c0_29 = arith.constant 0 : index
      %c0_30 = arith.constant 0 : index
      %c0_31 = arith.constant 0 : index
      %31 = vector.load %arg7[%c0_29, %c0_30, %c0_31] : memref<4x1x32xf32, #tpu.memory_space<vmem>>, vector<4x1x32xf32>
      %c0_32 = arith.constant 0 : index
      %c0_33 = arith.constant 0 : index
      %c0_34 = arith.constant 0 : index
      %32 = vector.load %arg6[%c0_32, %c0_33, %c0_34] : memref<4x1x1xf32, #tpu.memory_space<vmem>>, vector<4x1x1xf32>
      %33 = vector.broadcast %32 : vector<4x1x1xf32> to vector<4x1x32xf32>
      %34 = arith.divf %31, %33 : vector<4x1x32xf32>
      %c0_35 = arith.constant 0 : index
      %c0_36 = arith.constant 0 : index
      %c0_37 = arith.constant 0 : index
      %35 = vector.load %arg4[%c0_35, %c0_36, %c0_37] : memref<4x1x32xf32, #tpu.memory_space<vmem>>, vector<4x1x32xf32>
      tpu.vector_store %arg4[%c0_35, %c0_36, %c0_37], %34 {strides = array<i32>} : memref<4x1x32xf32, #tpu.memory_space<vmem>>, vector<4x1x32xf32>,
    } else {
    }
    return
  }
  func.func @transform_0(%arg0: i32, %arg1: i32) -> (i32, i32, i32) {
    %c0_i32 = arith.constant 0 : i32
    %c0_i32_0 = arith.constant 0 : i32
    %c0_i32_1 = arith.constant 0 : i32
    return %arg0, %c0_i32, %c0_i32_0 : i32, i32, i32
  }
  func.func @transform_1(%arg0: i32, %arg1: i32) -> (i32, i32, i32) {
    %c0_i32 = arith.constant 0 : i32
    %c0_i32_0 = arith.constant 0 : i32
    return %arg0, %arg1, %c0_i32 : i32, i32, i32
  }
  func.func @transform_2(%arg0: i32, %arg1: i32) -> (i32, i32, i32) {
    %c0_i32 = arith.constant 0 : i32
    %c0_i32_0 = arith.constant 0 : i32
    %c0_i32_1 = arith.constant 0 : i32
    return %arg0, %c0_i32, %c0_i32_0 : i32, i32, i32
  }
}

</mosaic_0001>

<llo_original>
// kernel: hyperpath_attention_aggregator_batched.1
$region0: #{hyperpath_attention_aggregator_batched.1}
  #allocation0 [shape = 'u32[]', space=smem, size = 0x4, offset = 0x4, fixed_abs, tag = 'smem constant byte address 0x4 - core index']
  #allocation1 [shape = 'u32[144,128]{1,0:T(1,128)}', space=vmem, size = 0x12000, scoped, tag = 'internal scratch']
  #allocation2 [shape = 'f32[4,1,1]{2,1,0:T(1,128)}', space=vmem, size = 0x800, scoped, tag = 'scratch operand']
  #allocation3 [shape = 'f32[4,1,1]{2,1,0:T(1,128)}', space=vmem, size = 0x800, scoped, tag = 'scratch operand']
  #allocation4 [shape = 'f32[4,1,32]{2,1,0:T(1,128)}', space=vmem, size = 0x800, scoped, tag = 'scratch operand']
  %s0 = inlined_call_operand.vmem [shape: f32[4,1,32], index: 0, kind: input, shape index: {}]
  %s1 = inlined_call_operand.vmem [shape: f32[4,8,32], index: 1, kind: input, shape index: {}]
  %s2 = inlined_call_operand.hbm [shape: f32[4,1,32], index: 2, kind: output, shape index: {}]
  %s3 = sld [smem:[#allocation0]]
  $region26: #{hyperpath_attention_aggregator_batched.1} parent=0
    _
  %s5 = ssub.s32 1, %s3
  %s6 = scalar_select 0, %s5, %s3
  $region1: #{hyperpath_attention_aggregator_batched.1} parent=0
    #allocation5 [shape = 'u8[2048]{0}', space=vmem, size = 0x800, scoped, tag = 'output window, operand 0, single buffered']
    #allocation6 [shape = 's32[1]{0}', space=sflag, size = 0x4, scoped, tag = 'scoped memory for hyperpath_attention_aggregator_batched.1']
    %7 = vsyncpa [#allocation6], 0
    // Predicated region
    $region2: #{hyperpath_attention_aggregator_batched.1} parent=1 // pred_check
      _
    $region3: #{hyperpath_attention_aggregator_batched.1} parent=1 // pred_check_branch
      %9 = sbr.rel (0) target = $region5
    $region4: #{hyperpath_attention_aggregator_batched.1} parent=1 // pred_region
      _
    $region5: #{hyperpath_attention_aggregator_batched.1} parent=1 // pred_fallthru
      _
    // Predicated region
    $region6: #{hyperpath_attention_aggregator_batched.1} parent=1 // pred_check
      _
    $region7: #{hyperpath_attention_aggregator_batched.1} parent=1 // pred_check_branch
      %11 = sbr.rel (0) target = $region9
    $region8: #{hyperpath_attention_aggregator_batched.1} parent=1 // pred_region
      _
    $region9: #{hyperpath_attention_aggregator_batched.1} parent=1 // pred_fallthru
      _
    %p12 = scmp.eq.s32.totalorder 0, 0
    // Predicated region
    $region10: #{hyperpath_attention_aggregator_batched.1} parent=1 // pred_check
      %p13 = pneg %p12
    $region11: #{hyperpath_attention_aggregator_batched.1} parent=1 // pred_check_branch
      %15 = sbr.rel (%p13) target = $region13
    $region12: #{hyperpath_attention_aggregator_batched.1} parent=1 // pred_region
      %vm16 = vcmask 0
      %17 = vst.msk [vmem:[#allocation2] sm:$0x1] %vm16, -inf
      %18 = vst.msk [vmem:[#allocation2 + $0x1] sm:$0x1] %vm16, -inf
      %19 = vst.msk [vmem:[#allocation2 + $0x2] sm:$0x1] %vm16, -inf
      %20 = vst.msk [vmem:[#allocation2 + $0x3] sm:$0x1] %vm16, -inf
      %21 = vst.msk [vmem:[#allocation3] sm:$0x1] %vm16, 0.0
      %22 = vst.msk [vmem:[#allocation3 + $0x1] sm:$0x1] %vm16, 0.0
      %23 = vst.msk [vmem:[#allocation3 + $0x2] sm:$0x1] %vm16, 0.0
      %24 = vst.msk [vmem:[#allocation3 + $0x3] sm:$0x1] %vm16, 0.0
      %vm25 = vcmask 253952
      %26 = vst.msk [vmem:[#allocation4] sm:$0x1] %vm25, 0.0
      %27 = vst.msk [vmem:[#allocation4 + $0x1] sm:$0x1] %vm25, 0.0
      %28 = vst.msk [vmem:[#allocation4 + $0x2] sm:$0x1] %vm25, 0.0
      %29 = vst.msk [vmem:[#allocation4 + $0x3] sm:$0x1] %vm25, 0.0
    $region13: #{hyperpath_attention_aggregator_batched.1} parent=1 // pred_fallthru
      _
    %v30 = vld [vmem:[%s1] sm:$0xff]
    %v31 = vld [vmem:[%s1 + $0x8] sm:$0xff]
    %v32 = vld [vmem:[%s1 + $0x10] sm:$0xff]
    %v33 = vld [vmem:[%s1 + $0x18] sm:$0xff]
    %v34 = vld [vmem:[%s0] sm:$0x1]
    %v35 = vld [vmem:[%s0 + $0x1] sm:$0x1]
    %v36 = vld [vmem:[%s0 + $0x2] sm:$0x1]
    %v37 = vld [vmem:[%s0 + $0x3] sm:$0x1]
    %vm38 = vcmask 261120
    %v40 = vsel %vm38, %v34, 0
    %v43 = vsel %vm38, %v30, 0
    %45 = vmatprep.subr.mxu0 0.0
    %46 = vmatpush1.xpose.msra.mxu0 %v43
    %47 = vmatprep.subr.mxu0 0.0
    %48 = vmatpush1.xpose.msra.mxu0 0.0
    %49 = vmatprep.subr.mxu0 0.0
    %50 = vmatpush1.xpose.msra.mxu0 0.0
    %51 = vmatprep.subr.mxu0 0.0
    %52 = vmatpush1.xpose.msra.mxu0 0.0
    %53 = vmatprep.subr.mxu0 0.0
    %54 = vmatpush1.xpose.msra.mxu0 0.0
    %55 = vmatprep.subr.mxu0 0.0
    %56 = vmatpush1.xpose.msra.mxu0 0.0
    %57 = vmatprep.subr.mxu0 0.0
    %58 = vmatpush1.xpose.msra.mxu0 0.0
    %59 = vmatprep.subr.mxu0 0.0
    %60 = vmatpush1.xpose.msra.mxu0 0.0
    %61 = vmatprep.subr.mxu0 0.0
    %62 = vmatpush1.xpose.msra.mxu0 0.0
    %63 = vmatprep.subr.mxu0 0.0
    %64 = vmatpush1.xpose.msra.mxu0 0.0
    %65 = vmatprep.subr.mxu0 0.0
    %66 = vmatpush1.xpose.msra.mxu0 0.0
    %67 = vmatprep.subr.mxu0 0.0
    %68 = vmatpush1.xpose.msra.mxu0 0.0
    %69 = vmatprep.subr.mxu0 0.0
    %70 = vmatpush1.xpose.msra.mxu0 0.0
    %71 = vmatprep.subr.mxu0 0.0
    %72 = vmatpush1.xpose.msra.mxu0 0.0
    %73 = vmatprep.subr.mxu0 0.0
    %74 = vmatpush1.xpose.msra.mxu0 0.0
    %75 = vmatprep.subr.mxu0 0.0
    %76 = vmatpush1.xpose.msra.mxu0 0.0
    %77 = vmatprep.subr.mxu0 0.0
    %78 = vmatpush1.xpose.msra.mxu0 0.0
    %79 = vmatprep.subr.mxu0 0.0
    %80 = vmatpush1.xpose.msra.mxu0 0.0
    %81 = vmatprep.subr.mxu0 0.0
    %82 = vmatpush1.xpose.msra.mxu0 0.0
    %83 = vmatprep.subr.mxu0 0.0
    %84 = vmatpush1.xpose.msra.mxu0 0.0
    %85 = vmatprep.subr.mxu0 0.0
    %86 = vmatpush1.xpose.msra.mxu0 0.0
    %87 = vmatprep.subr.mxu0 0.0
    %88 = vmatpush1.xpose.msra.mxu0 0.0
    %89 = vmatprep.subr.mxu0 0.0
    %90 = vmatpush1.xpose.msra.mxu0 0.0
    %91 = vmatprep.subr.mxu0 0.0
    %92 = vmatpush1.xpose.msra.mxu0 0.0
    %93 = vmatprep.subr.mxu0 0.0
    %94 = vmatpush1.xpose.msra.mxu0 0.0
    %95 = vmatprep.subr.mxu0 0.0
    %96 = vmatpush1.xpose.msra.mxu0 0.0
    %97 = vmatprep.subr.mxu0 0.0
    %98 = vmatpush1.xpose.msra.mxu0 0.0
    %99 = vmatprep.subr.mxu0 0.0
    %100 = vmatpush1.xpose.msra.mxu0 0.0
    %101 = vmatprep.subr.mxu0 0.0
    %102 = vmatpush1.xpose.msra.mxu0 0.0
    %103 = vmatprep.subr.mxu0 0.0
    %104 = vmatpush1.xpose.msra.mxu0 0.0
    %105 = vmatprep.subr.mxu0 0.0
    %106 = vmatpush1.xpose.msra.mxu0 0.0
    %107 = vmatprep.subr.mxu0 0.0
    %108 = vmatpush1.xpose.msra.mxu0 0.0
    %109 = vmatprep.mubr.f32.mxu0 0.0
    %110 = vmatmul.mubr.f32.gmra.mrb[0].mxu0 %v40
    %v111 = vpop.f32.mrb[0].mxu0
    %v112 = vadd.f32 0.0, %v111
    %v113 = vpop.f32.mrb[0].mxu0
    %114 = vdwg.mxu0
    %v116 = vsel %vm38, %v35, 0
    %v119 = vsel %vm38, %v31, 0
    %121 = vmatprep.subr.mxu0 0.0
    %122 = vmatpush1.xpose.msra.mxu0 %v119
    %123 = vmatprep.subr.mxu0 0.0
    %124 = vmatpush1.xpose.msra.mxu0 0.0
    %125 = vmatprep.subr.mxu0 0.0
    %126 = vmatpush1.xpose.msra.mxu0 0.0
    %127 = vmatprep.subr.mxu0 0.0
    %128 = vmatpush1.xpose.msra.mxu0 0.0
    %129 = vmatprep.subr.mxu0 0.0
    %130 = vmatpush1.xpose.msra.mxu0 0.0
    %131 = vmatprep.subr.mxu0 0.0
    %132 = vmatpush1.xpose.msra.mxu0 0.0
    %133 = vmatprep.subr.mxu0 0.0
    %134 = vmatpush1.xpose.msra.mxu0 0.0
    %135 = vmatprep.subr.mxu0 0.0
    %136 = vmatpush1.xpose.msra.mxu0 0.0
    %137 = vmatprep.subr.mxu0 0.0
    %138 = vmatpush1.xpose.msra.mxu0 0.0
    %139 = vmatprep.subr.mxu0 0.0
    %140 = vmatpush1.xpose.msra.mxu0 0.0
    %141 = vmatprep.subr.mxu0 0.0
    %142 = vmatpush1.xpose.msra.mxu0 0.0
    %143 = vmatprep.subr.mxu0 0.0
    %144 = vmatpush1.xpose.msra.mxu0 0.0
    %145 = vmatprep.subr.mxu0 0.0
    %146 = vmatpush1.xpose.msra.mxu0 0.0
    %147 = vmatprep.subr.mxu0 0.0
    %148 = vmatpush1.xpose.msra.mxu0 0.0
    %149 = vmatprep.subr.mxu0 0.0
    %150 = vmatpush1.xpose.msra.mxu0 0.0
    %151 = vmatprep.subr.mxu0 0.0
    %152 = vmatpush1.xpose.msra.mxu0 0.0
    %153 = vmatprep.subr.mxu0 0.0
    %154 = vmatpush1.xpose.msra.mxu0 0.0
    %155 = vmatprep.subr.mxu0 0.0
    %156 = vmatpush1.xpose.msra.mxu0 0.0
    %157 = vmatprep.subr.mxu0 0.0
    %158 = vmatpush1.xpose.msra.mxu0 0.0
    %159 = vmatprep.subr.mxu0 0.0
    %160 = vmatpush1.xpose.msra.mxu0 0.0
    %161 = vmatprep.subr.mxu0 0.0
    %162 = vmatpush1.xpose.msra.mxu0 0.0
    %163 = vmatprep.subr.mxu0 0.0
    %164 = vmatpush1.xpose.msra.mxu0 0.0
    %165 = vmatprep.subr.mxu0 0.0
    %166 = vmatpush1.xpose.msra.mxu0 0.0
    %167 = vmatprep.subr.mxu0 0.0
    %168 = vmatpush1.xpose.msra.mxu0 0.0
    %169 = vmatprep.subr.mxu0 0.0
    %170 = vmatpush1.xpose.msra.mxu0 0.0
    %171 = vmatprep.subr.mxu0 0.0
    %172 = vmatpush1.xpose.msra.mxu0 0.0
    %173 = vmatprep.subr.mxu0 0.0
    %174 = vmatpush1.xpose.msra.mxu0 0.0
    %175 = vmatprep.subr.mxu0 0.0
    %176 = vmatpush1.xpose.msra.mxu0 0.0
    %177 = vmatprep.subr.mxu0 0.0
    %178 = vmatpush1.xpose.msra.mxu0 0.0
    %179 = vmatprep.subr.mxu0 0.0
    %180 = vmatpush1.xpose.msra.mxu0 0.0
    %181 = vmatprep.subr.mxu0 0.0
    %182 = vmatpush1.xpose.msra.mxu0 0.0
    %183 = vmatprep.subr.mxu0 0.0
    %184 = vmatpush1.xpose.msra.mxu0 0.0
    %185 = vmatprep.mubr.f32.mxu0 0.0
    %186 = vmatmul.mubr.f32.gmra.mrb[0].mxu0 %v116
    %v187 = vpop.f32.mrb[0].mxu0
    %v188 = vadd.f32 0.0, %v187
    %v189 = vpop.f32.mrb[0].mxu0
    %190 = vdwg.mxu0
    %v192 = vsel %vm38, %v36, 0
    %v195 = vsel %vm38, %v32, 0
    %197 = vmatprep.subr.mxu0 0.0
    %198 = vmatpush1.xpose.msra.mxu0 %v195
    %199 = vmatprep.subr.mxu0 0.0
    %200 = vmatpush1.xpose.msra.mxu0 0.0
    %201 = vmatprep.subr.mxu0 0.0
    %202 = vmatpush1.xpose.msra.mxu0 0.0
    %203 = vmatprep.subr.mxu0 0.0
    %204 = vmatpush1.xpose.msra.mxu0 0.0
    %205 = vmatprep.subr.mxu0 0.0
    %206 = vmatpush1.xpose.msra.mxu0 0.0
    %207 = vmatprep.subr.mxu0 0.0
    %208 = vmatpush1.xpose.msra.mxu0 0.0
    %209 = vmatprep.subr.mxu0 0.0
    %210 = vmatpush1.xpose.msra.mxu0 0.0
    %211 = vmatprep.subr.mxu0 0.0
    %212 = vmatpush1.xpose.msra.mxu0 0.0
    %213 = vmatprep.subr.mxu0 0.0
    %214 = vmatpush1.xpose.msra.mxu0 0.0
    %215 = vmatprep.subr.mxu0 0.0
    %216 = vmatpush1.xpose.msra.mxu0 0.0
    %217 = vmatprep.subr.mxu0 0.0
    %218 = vmatpush1.xpose.msra.mxu0 0.0
    %219 = vmatprep.subr.mxu0 0.0
    %220 = vmatpush1.xpose.msra.mxu0 0.0
    %221 = vmatprep.subr.mxu0 0.0
    %222 = vmatpush1.xpose.msra.mxu0 0.0
    %223 = vmatprep.subr.mxu0 0.0
    %224 = vmatpush1.xpose.msra.mxu0 0.0
    %225 = vmatprep.subr.mxu0 0.0
    %226 = vmatpush1.xpose.msra.mxu0 0.0
    %227 = vmatprep.subr.mxu0 0.0
    %228 = vmatpush1.xpose.msra.mxu0 0.0
    %229 = vmatprep.subr.mxu0 0.0
    %230 = vmatpush1.xpose.msra.mxu0 0.0
    %231 = vmatprep.subr.mxu0 0.0
    %232 = vmatpush1.xpose.msra.mxu0 0.0
    %233 = vmatprep.subr.mxu0 0.0
    %234 = vmatpush1.xpose.msra.mxu0 0.0
    %235 = vmatprep.subr.mxu0 0.0
    %236 = vmatpush1.xpose.msra.mxu0 0.0
    %237 = vmatprep.subr.mxu0 0.0
    %238 = vmatpush1.xpose.msra.mxu0 0.0
    %239 = vmatprep.subr.mxu0 0.0
    %240 = vmatpush1.xpose.msra.mxu0 0.0
    %241 = vmatprep.subr.mxu0 0.0
    %242 = vmatpush1.xpose.msra.mxu0 0.0
    %243 = vmatprep.subr.mxu0 0.0
    %244 = vmatpush1.xpose.msra.mxu0 0.0
    %245 = vmatprep.subr.mxu0 0.0
    %246 = vmatpush1.xpose.msra.mxu0 0.0
    %247 = vmatprep.subr.mxu0 0.0
    %248 = vmatpush1.xpose.msra.mxu0 0.0
    %249 = vmatprep.subr.mxu0 0.0
    %250 = vmatpush1.xpose.msra.mxu0 0.0
    %251 = vmatprep.subr.mxu0 0.0
    %252 = vmatpush1.xpose.msra.mxu0 0.0
    %253 = vmatprep.subr.mxu0 0.0
    %254 = vmatpush1.xpose.msra.mxu0 0.0
    %255 = vmatprep.subr.mxu0 0.0
    %256 = vmatpush1.xpose.msra.mxu0 0.0
    %257 = vmatprep.subr.mxu0 0.0
    %258 = vmatpush1.xpose.msra.mxu0 0.0
    %259 = vmatprep.subr.mxu0 0.0
    %260 = vmatpush1.xpose.msra.mxu0 0.0
    %261 = vmatprep.mubr.f32.mxu0 0.0
    %262 = vmatmul.mubr.f32.gmra.mrb[0].mxu0 %v192
    %v263 = vpop.f32.mrb[0].mxu0
    %v264 = vadd.f32 0.0, %v263
    %v265 = vpop.f32.mrb[0].mxu0
    %266 = vdwg.mxu0
    %v268 = vsel %vm38, %v37, 0
    %v271 = vsel %vm38, %v33, 0
    %273 = vmatprep.subr.mxu0 0.0
    %274 = vmatpush1.xpose.msra.mxu0 %v271
    %275 = vmatprep.subr.mxu0 0.0
    %276 = vmatpush1.xpose.msra.mxu0 0.0
    %277 = vmatprep.subr.mxu0 0.0
    %278 = vmatpush1.xpose.msra.mxu0 0.0
    %279 = vmatprep.subr.mxu0 0.0
    %280 = vmatpush1.xpose.msra.mxu0 0.0
    %281 = vmatprep.subr.mxu0 0.0
    %282 = vmatpush1.xpose.msra.mxu0 0.0
    %283 = vmatprep.subr.mxu0 0.0
    %284 = vmatpush1.xpose.msra.mxu0 0.0
    %285 = vmatprep.subr.mxu0 0.0
    %286 = vmatpush1.xpose.msra.mxu0 0.0
    %287 = vmatprep.subr.mxu0 0.0
    %288 = vmatpush1.xpose.msra.mxu0 0.0
    %289 = vmatprep.subr.mxu0 0.0
    %290 = vmatpush1.xpose.msra.mxu0 0.0
    %291 = vmatprep.subr.mxu0 0.0
    %292 = vmatpush1.xpose.msra.mxu0 0.0
    %293 = vmatprep.subr.mxu0 0.0
    %294 = vmatpush1.xpose.msra.mxu0 0.0
    %295 = vmatprep.subr.mxu0 0.0
    %296 = vmatpush1.xpose.msra.mxu0 0.0
    %297 = vmatprep.subr.mxu0 0.0
    %298 = vmatpush1.xpose.msra.mxu0 0.0
    %299 = vmatprep.subr.mxu0 0.0
    %300 = vmatpush1.xpose.msra.mxu0 0.0
    %301 = vmatprep.subr.mxu0 0.0
    %302 = vmatpush1.xpose.msra.mxu0 0.0
    %303 = vmatprep.subr.mxu0 0.0
    %304 = vmatpush1.xpose.msra.mxu0 0.0
    %305 = vmatprep.subr.mxu0 0.0
    %306 = vmatpush1.xpose.msra.mxu0 0.0
    %307 = vmatprep.subr.mxu0 0.0
    %308 = vmatpush1.xpose.msra.mxu0 0.0
    %309 = vmatprep.subr.mxu0 0.0
    %310 = vmatpush1.xpose.msra.mxu0 0.0
    %311 = vmatprep.subr.mxu0 0.0
    %312 = vmatpush1.xpose.msra.mxu0 0.0
    %313 = vmatprep.subr.mxu0 0.0
    %314 = vmatpush1.xpose.msra.mxu0 0.0
    %315 = vmatprep.subr.mxu0 0.0
    %316 = vmatpush1.xpose.msra.mxu0 0.0
    %317 = vmatprep.subr.mxu0 0.0
    %318 = vmatpush1.xpose.msra.mxu0 0.0
    %319 = vmatprep.subr.mxu0 0.0
    %320 = vmatpush1.xpose.msra.mxu0 0.0
    %321 = vmatprep.subr.mxu0 0.0
    %322 = vmatpush1.xpose.msra.mxu0 0.0
    %323 = vmatprep.subr.mxu0 0.0
    %324 = vmatpush1.xpose.msra.mxu0 0.0
    %325 = vmatprep.subr.mxu0 0.0
    %326 = vmatpush1.xpose.msra.mxu0 0.0
    %327 = vmatprep.subr.mxu0 0.0
    %328 = vmatpush1.xpose.msra.mxu0 0.0
    %329 = vmatprep.subr.mxu0 0.0
    %330 = vmatpush1.xpose.msra.mxu0 0.0
    %331 = vmatprep.subr.mxu0 0.0
    %332 = vmatpush1.xpose.msra.mxu0 0.0
    %333 = vmatprep.subr.mxu0 0.0
    %334 = vmatpush1.xpose.msra.mxu0 0.0
    %335 = vmatprep.subr.mxu0 0.0
    %336 = vmatpush1.xpose.msra.mxu0 0.0
    %337 = vmatprep.mubr.f32.mxu0 0.0
    %338 = vmatmul.mubr.f32.gmra.mrb[0].mxu0 %v268
    %v339 = vpop.f32.mrb[0].mxu0
    %v340 = vadd.f32 0.0, %v339
    %v341 = vpop.f32.mrb[0].mxu0
    %342 = vdwg.mxu0
    %v343 = vld [vmem:[#allocation2] sm:$0x1]
    %v344 = vld [vmem:[#allocation2 + $0x1] sm:$0x1]
    %v345 = vld [vmem:[#allocation2 + $0x2] sm:$0x1]
    %v346 = vld [vmem:[#allocation2 + $0x3] sm:$0x1]
    %vm347 = vcmask 57344
    %v348 = vsel %vm347, %v112, -inf
    %349 = vmax.xlane.f32.xlu0 %v348
    %v350 = vpop.xlane.xlu0 %349
    %v351 = vsel %vm347, %v188, -inf
    %352 = vmax.xlane.f32.xlu0 %v351
    %v353 = vpop.xlane.xlu0 %352
    %v354 = vsel %vm347, %v264, -inf
    %355 = vmax.xlane.f32.xlu0 %v354
    %v356 = vpop.xlane.xlu0 %355
    %v357 = vsel %vm347, %v340, -inf
    %358 = vmax.xlane.f32.xlu0 %v357
    %v359 = vpop.xlane.xlu0 %358
    %v360 = vmax.f32 %v343, %v350
    %v361 = vmax.f32 %v344, %v353
    %v362 = vmax.f32 %v345, %v356
    %v363 = vmax.f32 %v346, %v359
    %v364 = vsub.f32 %v343, %v360
    %v365 = vsub.f32 %v344, %v361
    %v366 = vsub.f32 %v345, %v362
    %v367 = vsub.f32 %v346, %v363
    %v368 = vmul.f32 %v364, 1.442695
    %v369 = vpow.pop %v368
    %v370 = vmul.f32 %v365, 1.442695
    %v371 = vpow.pop %v370
    %v372 = vmul.f32 %v366, 1.442695
    %v373 = vpow.pop %v372
    %v374 = vmul.f32 %v367, 1.442695
    %v375 = vpow.pop %v374
    %377 = vset.pattern.permute.xlu0 0
    %378 = vperm.xlu0 %377, %v360
    %v379 = vpop.permute.xlu0 %378
    %v381 = vlaneseq
    %v382 = vshrl.u32 %v381, 7
    %v383 = vsub.s32 0, %v382
    %v384 = vrot.slane %v379, %v383
    %386 = vset.pattern.permute.xlu0 0
    %387 = vperm.xlu0 %386, %v361
    %v388 = vpop.permute.xlu0 %387
    %v390 = vlaneseq
    %v391 = vshrl.u32 %v390, 7
    %v392 = vsub.s32 0, %v391
    %v393 = vrot.slane %v388, %v392
    %395 = vset.pattern.permute.xlu0 0
    %396 = vperm.xlu0 %395, %v362
    %v397 = vpop.permute.xlu0 %396
    %v399 = vlaneseq
    %v400 = vshrl.u32 %v399, 7
    %v401 = vsub.s32 0, %v400
    %v402 = vrot.slane %v397, %v401
    %404 = vset.pattern.permute.xlu0 0
    %405 = vperm.xlu0 %404, %v363
    %v406 = vpop.permute.xlu0 %405
    %v408 = vlaneseq
    %v409 = vshrl.u32 %v408, 7
    %v410 = vsub.s32 0, %v409
    %v411 = vrot.slane %v406, %v410
    %v412 = vsub.f32 %v112, %v384
    %v413 = vsub.f32 %v188, %v393
    %v414 = vsub.f32 %v264, %v402
    %v415 = vsub.f32 %v340, %v411
    %v416 = vmul.f32 %v412, 1.442695
    %v417 = vpow.pop %v416
    %v418 = vmul.f32 %v413, 1.442695
    %v419 = vpow.pop %v418
    %v420 = vmul.f32 %v414, 1.442695
    %v421 = vpow.pop %v420
    %v422 = vmul.f32 %v415, 1.442695
    %v423 = vpow.pop %v422
    %v424 = vld [vmem:[#allocation3] sm:$0x1]
    %v425 = vld [vmem:[#allocation3 + $0x1] sm:$0x1]
    %v426 = vld [vmem:[#allocation3 + $0x2] sm:$0x1]
    %v427 = vld [vmem:[#allocation3 + $0x3] sm:$0x1]
    %v428 = vmul.f32 %v369, %v424
    %v429 = vmul.f32 %v371, %v425
    %v430 = vmul.f32 %v373, %v426
    %v431 = vmul.f32 %v375, %v427
    %v432 = vsel %vm347, %v417, 0.0
    %433 = vadd.xlane.f32.xlu0 %v432
    %v434 = vpop.xlane.xlu0 %433
    %v435 = vsel %vm347, %v419, 0.0
    %436 = vadd.xlane.f32.xlu0 %v435
    %v437 = vpop.xlane.xlu0 %436
    %v438 = vsel %vm347, %v421, 0.0
    %439 = vadd.xlane.f32.xlu0 %v438
    %v440 = vpop.xlane.xlu0 %439
    %v441 = vsel %vm347, %v423, 0.0
    %442 = vadd.xlane.f32.xlu0 %v441
    %v443 = vpop.xlane.xlu0 %442
    %v444 = vadd.f32 %v428, %v434
    %v445 = vadd.f32 %v429, %v437
    %v446 = vadd.f32 %v430, %v440
    %v447 = vadd.f32 %v431, %v443
    %vm448 = vcmask 0
    %449 = vst.msk [vmem:[#allocation3] sm:$0x1] %vm448, %v444
    %450 = vst.msk [vmem:[#allocation3 + $0x1] sm:$0x1] %vm448, %v445
    %451 = vst.msk [vmem:[#allocation3 + $0x2] sm:$0x1] %vm448, %v446
    %452 = vst.msk [vmem:[#allocation3 + $0x3] sm:$0x1] %vm448, %v447
    %v453 = vld [vmem:[#allocation4] sm:$0x1]
    %v454 = vld [vmem:[#allocation4 + $0x1] sm:$0x1]
    %v455 = vld [vmem:[#allocation4 + $0x2] sm:$0x1]
    %v456 = vld [vmem:[#allocation4 + $0x3] sm:$0x1]
    %458 = vset.pattern.permute.xlu0 0
    %459 = vperm.xlu0 %458, %v369
    %v460 = vpop.permute.xlu0 %459
    %v462 = vlaneseq
    %v463 = vshrl.u32 %v462, 7
    %v464 = vsub.s32 0, %v463
    %v465 = vrot.slane %v460, %v464
    %467 = vset.pattern.permute.xlu0 0
    %468 = vperm.xlu0 %467, %v371
    %v469 = vpop.permute.xlu0 %468
    %v471 = vlaneseq
    %v472 = vshrl.u32 %v471, 7
    %v473 = vsub.s32 0, %v472
    %v474 = vrot.slane %v469, %v473
    %476 = vset.pattern.permute.xlu0 0
    %477 = vperm.xlu0 %476, %v373
    %v478 = vpop.permute.xlu0 %477
    %v480 = vlaneseq
    %v481 = vshrl.u32 %v480, 7
    %v482 = vsub.s32 0, %v481
    %v483 = vrot.slane %v478, %v482
    %485 = vset.pattern.permute.xlu0 0
    %486 = vperm.xlu0 %485, %v375
    %v487 = vpop.permute.xlu0 %486
    %v489 = vlaneseq
    %v490 = vshrl.u32 %v489, 7
    %v491 = vsub.s32 0, %v490
    %v492 = vrot.slane %v487, %v491
    %v493 = vmul.f32 %v465, %v453
    %v494 = vmul.f32 %v474, %v454
    %v495 = vmul.f32 %v483, %v455
    %v496 = vmul.f32 %v492, %v456
    %vm497 = vcmask 64512
    %v499 = vsel %vm497, %v417, 0
    %501 = vmatprep.subr.mxu0 0.0
    %502 = vmatpush1.msra.mxu0 %v30
    %503 = vmatprep.subr.mxu0 0.0
    %504 = vmatpush1.msra.mxu0 0.0
    %505 = vmatprep.subr.mxu0 0.0
    %506 = vmatpush1.msra.mxu0 0.0
    %507 = vmatprep.subr.mxu0 0.0
    %508 = vmatpush1.msra.mxu0 0.0
    %509 = vmatprep.subr.mxu0 0.0
    %510 = vmatpush1.msra.mxu0 0.0
    %511 = vmatprep.subr.mxu0 0.0
    %512 = vmatpush1.msra.mxu0 0.0
    %513 = vmatprep.subr.mxu0 0.0
    %514 = vmatpush1.msra.mxu0 0.0
    %515 = vmatprep.subr.mxu0 0.0
    %516 = vmatpush1.msra.mxu0 0.0
    %517 = vmatprep.subr.mxu0 0.0
    %518 = vmatpush1.msra.mxu0 0.0
    %519 = vmatprep.subr.mxu0 0.0
    %520 = vmatpush1.msra.mxu0 0.0
    %521 = vmatprep.subr.mxu0 0.0
    %522 = vmatpush1.msra.mxu0 0.0
    %523 = vmatprep.subr.mxu0 0.0
    %524 = vmatpush1.msra.mxu0 0.0
    %525 = vmatprep.subr.mxu0 0.0
    %526 = vmatpush1.msra.mxu0 0.0
    %527 = vmatprep.subr.mxu0 0.0
    %528 = vmatpush1.msra.mxu0 0.0
    %529 = vmatprep.subr.mxu0 0.0
    %530 = vmatpush1.msra.mxu0 0.0
    %531 = vmatprep.subr.mxu0 0.0
    %532 = vmatpush1.msra.mxu0 0.0
    %533 = vmatprep.subr.mxu0 0.0
    %534 = vmatpush1.msra.mxu0 0.0
    %535 = vmatprep.subr.mxu0 0.0
    %536 = vmatpush1.msra.mxu0 0.0
    %537 = vmatprep.subr.mxu0 0.0
    %538 = vmatpush1.msra.mxu0 0.0
    %539 = vmatprep.subr.mxu0 0.0
    %540 = vmatpush1.msra.mxu0 0.0
    %541 = vmatprep.subr.mxu0 0.0
    %542 = vmatpush1.msra.mxu0 0.0
    %543 = vmatprep.subr.mxu0 0.0
    %544 = vmatpush1.msra.mxu0 0.0
    %545 = vmatprep.subr.mxu0 0.0
    %546 = vmatpush1.msra.mxu0 0.0
    %547 = vmatprep.subr.mxu0 0.0
    %548 = vmatpush1.msra.mxu0 0.0
    %549 = vmatprep.subr.mxu0 0.0
    %550 = vmatpush1.msra.mxu0 0.0
    %551 = vmatprep.subr.mxu0 0.0
    %552 = vmatpush1.msra.mxu0 0.0
    %553 = vmatprep.subr.mxu0 0.0
    %554 = vmatpush1.msra.mxu0 0.0
    %555 = vmatprep.subr.mxu0 0.0
    %556 = vmatpush1.msra.mxu0 0.0
    %557 = vmatprep.subr.mxu0 0.0
    %558 = vmatpush1.msra.mxu0 0.0
    %559 = vmatprep.subr.mxu0 0.0
    %560 = vmatpush1.msra.mxu0 0.0
    %561 = vmatprep.subr.mxu0 0.0
    %562 = vmatpush1.msra.mxu0 0.0
    %563 = vmatprep.subr.mxu0 0.0
    %564 = vmatpush1.msra.mxu0 0.0
    %565 = vmatprep.mubr.f32.mxu0 0.0
    %566 = vmatmul.mubr.f32.gmra.mrb[0].mxu0 %v499
    %v567 = vpop.f32.mrb[0].mxu0
    %v568 = vadd.f32 0.0, %v567
    %v569 = vpop.f32.mrb[0].mxu0
    %570 = vdwg.mxu0
    %v572 = vsel %vm497, %v419, 0
    %574 = vmatprep.subr.mxu0 0.0
    %575 = vmatpush1.msra.mxu0 %v31
    %576 = vmatprep.subr.mxu0 0.0
    %577 = vmatpush1.msra.mxu0 0.0
    %578 = vmatprep.subr.mxu0 0.0
    %579 = vmatpush1.msra.mxu0 0.0
    %580 = vmatprep.subr.mxu0 0.0
    %581 = vmatpush1.msra.mxu0 0.0
    %582 = vmatprep.subr.mxu0 0.0
    %583 = vmatpush1.msra.mxu0 0.0
    %584 = vmatprep.subr.mxu0 0.0
    %585 = vmatpush1.msra.mxu0 0.0
    %586 = vmatprep.subr.mxu0 0.0
    %587 = vmatpush1.msra.mxu0 0.0
    %588 = vmatprep.subr.mxu0 0.0
    %589 = vmatpush1.msra.mxu0 0.0
    %590 = vmatprep.subr.mxu0 0.0
    %591 = vmatpush1.msra.mxu0 0.0
    %592 = vmatprep.subr.mxu0 0.0
    %593 = vmatpush1.msra.mxu0 0.0
    %594 = vmatprep.subr.mxu0 0.0
    %595 = vmatpush1.msra.mxu0 0.0
    %596 = vmatprep.subr.mxu0 0.0
    %597 = vmatpush1.msra.mxu0 0.0
    %598 = vmatprep.subr.mxu0 0.0
    %599 = vmatpush1.msra.mxu0 0.0
    %600 = vmatprep.subr.mxu0 0.0
    %601 = vmatpush1.msra.mxu0 0.0
    %602 = vmatprep.subr.mxu0 0.0
    %603 = vmatpush1.msra.mxu0 0.0
    %604 = vmatprep.subr.mxu0 0.0
    %605 = vmatpush1.msra.mxu0 0.0
    %606 = vmatprep.subr.mxu0 0.0
    %607 = vmatpush1.msra.mxu0 0.0
    %608 = vmatprep.subr.mxu0 0.0
    %609 = vmatpush1.msra.mxu0 0.0
    %610 = vmatprep.subr.mxu0 0.0
    %611 = vmatpush1.msra.mxu0 0.0
    %612 = vmatprep.subr.mxu0 0.0
    %613 = vmatpush1.msra.mxu0 0.0
    %614 = vmatprep.subr.mxu0 0.0
    %615 = vmatpush1.msra.mxu0 0.0
    %616 = vmatprep.subr.mxu0 0.0
    %617 = vmatpush1.msra.mxu0 0.0
    %618 = vmatprep.subr.mxu0 0.0
    %619 = vmatpush1.msra.mxu0 0.0
    %620 = vmatprep.subr.mxu0 0.0
    %621 = vmatpush1.msra.mxu0 0.0
    %622 = vmatprep.subr.mxu0 0.0
    %623 = vmatpush1.msra.mxu0 0.0
    %624 = vmatprep.subr.mxu0 0.0
    %625 = vmatpush1.msra.mxu0 0.0
    %626 = vmatprep.subr.mxu0 0.0
    %627 = vmatpush1.msra.mxu0 0.0
    %628 = vmatprep.subr.mxu0 0.0
    %629 = vmatpush1.msra.mxu0 0.0
    %630 = vmatprep.subr.mxu0 0.0
    %631 = vmatpush1.msra.mxu0 0.0
    %632 = vmatprep.subr.mxu0 0.0
    %633 = vmatpush1.msra.mxu0 0.0
    %634 = vmatprep.subr.mxu0 0.0
    %635 = vmatpush1.msra.mxu0 0.0
    %636 = vmatprep.subr.mxu0 0.0
    %637 = vmatpush1.msra.mxu0 0.0
    %638 = vmatprep.mubr.f32.mxu0 0.0
    %639 = vmatmul.mubr.f32.gmra.mrb[0].mxu0 %v572
    %v640 = vpop.f32.mrb[0].mxu0
    %v641 = vadd.f32 0.0, %v640
    %v642 = vpop.f32.mrb[0].mxu0
    %643 = vdwg.mxu0
    %v645 = vsel %vm497, %v421, 0
    %647 = vmatprep.subr.mxu0 0.0
    %648 = vmatpush1.msra.mxu0 %v32
    %649 = vmatprep.subr.mxu0 0.0
    %650 = vmatpush1.msra.mxu0 0.0
    %651 = vmatprep.subr.mxu0 0.0
    %652 = vmatpush1.msra.mxu0 0.0
    %653 = vmatprep.subr.mxu0 0.0
    %654 = vmatpush1.msra.mxu0 0.0
    %655 = vmatprep.subr.mxu0 0.0
    %656 = vmatpush1.msra.mxu0 0.0
    %657 = vmatprep.subr.mxu0 0.0
    %658 = vmatpush1.msra.mxu0 0.0
    %659 = vmatprep.subr.mxu0 0.0
    %660 = vmatpush1.msra.mxu0 0.0
    %661 = vmatprep.subr.mxu0 0.0
    %662 = vmatpush1.msra.mxu0 0.0
    %663 = vmatprep.subr.mxu0 0.0
    %664 = vmatpush1.msra.mxu0 0.0
    %665 = vmatprep.subr.mxu0 0.0
    %666 = vmatpush1.msra.mxu0 0.0
    %667 = vmatprep.subr.mxu0 0.0
    %668 = vmatpush1.msra.mxu0 0.0
    %669 = vmatprep.subr.mxu0 0.0
    %670 = vmatpush1.msra.mxu0 0.0
    %671 = vmatprep.subr.mxu0 0.0
    %672 = vmatpush1.msra.mxu0 0.0
    %673 = vmatprep.subr.mxu0 0.0
    %674 = vmatpush1.msra.mxu0 0.0
    %675 = vmatprep.subr.mxu0 0.0
    %676 = vmatpush1.msra.mxu0 0.0
    %677 = vmatprep.subr.mxu0 0.0
    %678 = vmatpush1.msra.mxu0 0.0
    %679 = vmatprep.subr.mxu0 0.0
    %680 = vmatpush1.msra.mxu0 0.0
    %681 = vmatprep.subr.mxu0 0.0
    %682 = vmatpush1.msra.mxu0 0.0
    %683 = vmatprep.subr.mxu0 0.0
    %684 = vmatpush1.msra.mxu0 0.0
    %685 = vmatprep.subr.mxu0 0.0
    %686 = vmatpush1.msra.mxu0 0.0
    %687 = vmatprep.subr.mxu0 0.0
    %688 = vmatpush1.msra.mxu0 0.0
    %689 = vmatprep.subr.mxu0 0.0
    %690 = vmatpush1.msra.mxu0 0.0
    %691 = vmatprep.subr.mxu0 0.0
    %692 = vmatpush1.msra.mxu0 0.0
    %693 = vmatprep.subr.mxu0 0.0
    %694 = vmatpush1.msra.mxu0 0.0
    %695 = vmatprep.subr.mxu0 0.0
    %696 = vmatpush1.msra.mxu0 0.0
    %697 = vmatprep.subr.mxu0 0.0
    %698 = vmatpush1.msra.mxu0 0.0
    %699 = vmatprep.subr.mxu0 0.0
    %700 = vmatpush1.msra.mxu0 0.0
    %701 = vmatprep.subr.mxu0 0.0
    %702 = vmatpush1.msra.mxu0 0.0
    %703 = vmatprep.subr.mxu0 0.0
    %704 = vmatpush1.msra.mxu0 0.0
    %705 = vmatprep.subr.mxu0 0.0
    %706 = vmatpush1.msra.mxu0 0.0
    %707 = vmatprep.subr.mxu0 0.0
    %708 = vmatpush1.msra.mxu0 0.0
    %709 = vmatprep.subr.mxu0 0.0
    %710 = vmatpush1.msra.mxu0 0.0
    %711 = vmatprep.mubr.f32.mxu0 0.0
    %712 = vmatmul.mubr.f32.gmra.mrb[0].mxu0 %v645
    %v713 = vpop.f32.mrb[0].mxu0
    %v714 = vadd.f32 0.0, %v713
    %v715 = vpop.f32.mrb[0].mxu0
    %716 = vdwg.mxu0
    %v718 = vsel %vm497, %v423, 0
    %720 = vmatprep.subr.mxu0 0.0
    %721 = vmatpush1.msra.mxu0 %v33
    %722 = vmatprep.subr.mxu0 0.0
    %723 = vmatpush1.msra.mxu0 0.0
    %724 = vmatprep.subr.mxu0 0.0
    %725 = vmatpush1.msra.mxu0 0.0
    %726 = vmatprep.subr.mxu0 0.0
    %727 = vmatpush1.msra.mxu0 0.0
    %728 = vmatprep.subr.mxu0 0.0
    %729 = vmatpush1.msra.mxu0 0.0
    %730 = vmatprep.subr.mxu0 0.0
    %731 = vmatpush1.msra.mxu0 0.0
    %732 = vmatprep.subr.mxu0 0.0
    %733 = vmatpush1.msra.mxu0 0.0
    %734 = vmatprep.subr.mxu0 0.0
    %735 = vmatpush1.msra.mxu0 0.0
    %736 = vmatprep.subr.mxu0 0.0
    %737 = vmatpush1.msra.mxu0 0.0
    %738 = vmatprep.subr.mxu0 0.0
    %739 = vmatpush1.msra.mxu0 0.0
    %740 = vmatprep.subr.mxu0 0.0
    %741 = vmatpush1.msra.mxu0 0.0
    %742 = vmatprep.subr.mxu0 0.0
    %743 = vmatpush1.msra.mxu0 0.0
    %744 = vmatprep.subr.mxu0 0.0
    %745 = vmatpush1.msra.mxu0 0.0
    %746 = vmatprep.subr.mxu0 0.0
    %747 = vmatpush1.msra.mxu0 0.0
    %748 = vmatprep.subr.mxu0 0.0
    %749 = vmatpush1.msra.mxu0 0.0
    %750 = vmatprep.subr.mxu0 0.0
    %751 = vmatpush1.msra.mxu0 0.0
    %752 = vmatprep.subr.mxu0 0.0
    %753 = vmatpush1.msra.mxu0 0.0
    %754 = vmatprep.subr.mxu0 0.0
    %755 = vmatpush1.msra.mxu0 0.0
    %756 = vmatprep.subr.mxu0 0.0
    %757 = vmatpush1.msra.mxu0 0.0
    %758 = vmatprep.subr.mxu0 0.0
    %759 = vmatpush1.msra.mxu0 0.0
    %760 = vmatprep.subr.mxu0 0.0
    %761 = vmatpush1.msra.mxu0 0.0
    %762 = vmatprep.subr.mxu0 0.0
    %763 = vmatpush1.msra.mxu0 0.0
    %764 = vmatprep.subr.mxu0 0.0
    %765 = vmatpush1.msra.mxu0 0.0
    %766 = vmatprep.subr.mxu0 0.0
    %767 = vmatpush1.msra.mxu0 0.0
    %768 = vmatprep.subr.mxu0 0.0
    %769 = vmatpush1.msra.mxu0 0.0
    %770 = vmatprep.subr.mxu0 0.0
    %771 = vmatpush1.msra.mxu0 0.0
    %772 = vmatprep.subr.mxu0 0.0
    %773 = vmatpush1.msra.mxu0 0.0
    %774 = vmatprep.subr.mxu0 0.0
    %775 = vmatpush1.msra.mxu0 0.0
    %776 = vmatprep.subr.mxu0 0.0
    %777 = vmatpush1.msra.mxu0 0.0
    %778 = vmatprep.subr.mxu0 0.0
    %779 = vmatpush1.msra.mxu0 0.0
    %780 = vmatprep.subr.mxu0 0.0
    %781 = vmatpush1.msra.mxu0 0.0
    %782 = vmatprep.subr.mxu0 0.0
    %783 = vmatpush1.msra.mxu0 0.0
    %784 = vmatprep.mubr.f32.mxu0 0.0
    %785 = vmatmul.mubr.f32.gmra.mrb[0].mxu0 %v718
    %v786 = vpop.f32.mrb[0].mxu0
    %v787 = vadd.f32 0.0, %v786
    %v788 = vpop.f32.mrb[0].mxu0
    %789 = vdwg.mxu0
    %v790 = vadd.f32 %v493, %v568
    %v791 = vadd.f32 %v494, %v641
    %v792 = vadd.f32 %v495, %v714
    %v793 = vadd.f32 %v496, %v787
    %vm794 = vcmask 253952
    %795 = vst.msk [vmem:[#allocation4] sm:$0x1] %vm794, %v790
    %796 = vst.msk [vmem:[#allocation4 + $0x1] sm:$0x1] %vm794, %v791
    %797 = vst.msk [vmem:[#allocation4 + $0x2] sm:$0x1] %vm794, %v792
    %798 = vst.msk [vmem:[#allocation4 + $0x3] sm:$0x1] %vm794, %v793
    %799 = vst.msk [vmem:[#allocation2] sm:$0x1] %vm448, %v360
    %800 = vst.msk [vmem:[#allocation2 + $0x1] sm:$0x1] %vm448, %v361
    %801 = vst.msk [vmem:[#allocation2 + $0x2] sm:$0x1] %vm448, %v362
    %802 = vst.msk [vmem:[#allocation2 + $0x3] sm:$0x1] %vm448, %v363
    // Predicated region
    $region14: #{hyperpath_attention_aggregator_batched.1} parent=1 // pred_check
      %p803 = pneg %p12
    $region15: #{hyperpath_attention_aggregator_batched.1} parent=1 // pred_check_branch
      %805 = sbr.rel (%p803) target = $region17
    $region16: #{hyperpath_attention_aggregator_batched.1} parent=1 // pred_region
      %v806 = vld [vmem:[#allocation4] sm:$0x1]
      %v807 = vld [vmem:[#allocation4 + $0x1] sm:$0x1]
      %v808 = vld [vmem:[#allocation4 + $0x2] sm:$0x1]
      %v809 = vld [vmem:[#allocation4 + $0x3] sm:$0x1]
      %v810 = vld [vmem:[#allocation3] sm:$0x1]
      %v811 = vld [vmem:[#allocation3 + $0x1] sm:$0x1]
      %v812 = vld [vmem:[#allocation3 + $0x2] sm:$0x1]
      %v813 = vld [vmem:[#allocation3 + $0x3] sm:$0x1]
      %815 = vset.pattern.permute.xlu0 0
      %816 = vperm.xlu0 %815, %v810
      %v817 = vpop.permute.xlu0 %816
      %v819 = vlaneseq
      %v820 = vshrl.u32 %v819, 7
      %v821 = vsub.s32 0, %v820
      %v822 = vrot.slane %v817, %v821
      %824 = vset.pattern.permute.xlu0 0
      %825 = vperm.xlu0 %824, %v811
      %v826 = vpop.permute.xlu0 %825
      %v828 = vlaneseq
      %v829 = vshrl.u32 %v828, 7
      %v830 = vsub.s32 0, %v829
      %v831 = vrot.slane %v826, %v830
      %833 = vset.pattern.permute.xlu0 0
      %834 = vperm.xlu0 %833, %v812
      %v835 = vpop.permute.xlu0 %834
      %v837 = vlaneseq
      %v838 = vshrl.u32 %v837, 7
      %v839 = vsub.s32 0, %v838
      %v840 = vrot.slane %v835, %v839
      %842 = vset.pattern.permute.xlu0 0
      %843 = vperm.xlu0 %842, %v813
      %v844 = vpop.permute.xlu0 %843
      %v846 = vlaneseq
      %v847 = vshrl.u32 %v846, 7
      %v848 = vsub.s32 0, %v847
      %v849 = vrot.slane %v844, %v848
      %v850 = vrcp.pop %v822
      %v851 = vmul.f32 %v806, %v850
      %v852 = vrcp.pop %v831
      %v853 = vmul.f32 %v807, %v852
      %v854 = vrcp.pop %v840
      %v855 = vmul.f32 %v808, %v854
      %v856 = vrcp.pop %v849
      %v857 = vmul.f32 %v809, %v856
      %858 = vst.msk [vmem:[#allocation5] sm:$0x1] %vm794, %v851
      %859 = vst.msk [vmem:[#allocation5 + $0x1] sm:$0x1] %vm794, %v853
      %860 = vst.msk [vmem:[#allocation5 + $0x2] sm:$0x1] %vm794, %v855
      %861 = vst.msk [vmem:[#allocation5 + $0x3] sm:$0x1] %vm794, %v857
    $region17: #{hyperpath_attention_aggregator_batched.1} parent=1 // pred_fallthru
      _
    // Predicated region
    $region18: #{hyperpath_attention_aggregator_batched.1} parent=1 // pred_check
      _
    $region19: #{hyperpath_attention_aggregator_batched.1} parent=1 // pred_check_branch
      %863 = sbr.rel (0) target = $region21
    $region20: #{hyperpath_attention_aggregator_batched.1} parent=1 // pred_region
      %s865 = ssub.s32 64, 64
      %866 = vsyncadd [#allocation6], %s865
      %s867 = sshll.u32 [#allocation5], 4
      %s868 = int_to_ptr.vmem [resolvable:$true] %s867
      %873 = dma.vmem_to_hbm [thread:$0]  %s868, 64, %s2, [#allocation6], 16, 16, 1
    $region21: #{hyperpath_attention_aggregator_batched.1} parent=1 // pred_fallthru
      _
    // Predicated region
    $region22: #{hyperpath_attention_aggregator_batched.1} parent=1 // pred_check
      _
    $region23: #{hyperpath_attention_aggregator_batched.1} parent=1 // pred_check_branch
      %875 = sbr.rel (0) target = $region25
    $region24: #{hyperpath_attention_aggregator_batched.1} parent=1 // pred_region
      %876 = dma.done [#allocation6], 64
    $region25: #{hyperpath_attention_aggregator_batched.1} parent=1 // pred_fallthru
      _
    %877 = vsyncpa [#allocation6], 1

</llo_original>
